<compile_context>
chip_gen: v7x
topology: tpu7x:2x2x1
jax: 0.10.0
libtpu: 0.0.40
codegen_flags: <defaults>
</compile_context>

<pallas_src>
import functools

import jax
import jax.numpy as jnp
from jax.experimental import pallas as pl
from jax.experimental.pallas import tpu as pltpu


def _round_up(x, m):
    return ((x + m - 1) // m) * m


def _pick_nll_tiles(R, V, itemsize, tile_rows, tile_vocab,
                    vmem_budget=12 * 1024 * 1024):
    """Clamp (row, vocab) tiles to the requested sizes and a VMEM budget
    (double-buffered logits tile is the dominant allocation)."""
    tm = _round_up(min(tile_rows, _round_up(R, 8)), 8)
    tv = _round_up(min(tile_vocab, _round_up(V, 128)), 128)
    while 2 * tm * tv * itemsize > vmem_budget and tv > 128:
        tv = _round_up(max(128, tv // 2), 128)
    return tm, tv


# ------------------------------------------------------------------ NLL ----
def _nll_rows_kernel(logits_ref, tgt_ref, mask_ref, out_ref, *, tv):
    """Per-row masked NLL, accumulated over the vocab grid axis.

    logits_ref : (TM, TV)  native dtype (f32/bf16) log-probabilities
    tgt_ref    : (TM, 1)   int32 target indices (global vocab index)
    mask_ref   : (TM, 1)   f32 mask
    out_ref    : (TM, 1)   f32, resident across the vocab axis (accumulator)
    """
    k = pl.program_id(1)

    @pl.when(k == 0)
    def _():
        out_ref[...] = jnp.zeros_like(out_ref)

    lc = logits_ref[...].astype(jnp.float32)                        # (TM, TV)
    cols = k * tv + jax.lax.broadcasted_iota(jnp.int32, lc.shape, 1)
    # select-reduce: only the column matching the target contributes.
    sel = jnp.where(cols == tgt_ref[...], lc, 0.0)
    out_ref[...] += -jnp.sum(sel, axis=-1, keepdims=True)

    # fold the mask exactly once, on the final vocab step
    @pl.when(k == pl.num_programs(1) - 1)
    def _():
        out_ref[...] = out_ref[...] * mask_ref[...]


def _masked_nll_sum(logits2d, targets, mask, *, tile_rows=256, tile_vocab=2048):
    """sum_i mask_i * NLL(logits2d_i, targets_i) via a gridded Pallas kernel."""
    R, V = logits2d.shape

    tm, tv = _pick_nll_tiles(R, V, logits2d.dtype.itemsize,
                             tile_rows, tile_vocab)
    r_pad = _round_up(R, tm)
    v_pad = _round_up(V, tv)

    if r_pad != R or v_pad != V:
        # zero-padding is safe: padded cols never match a (valid) target, and
        # padded rows carry mask == 0.
        logits2d = jnp.pad(logits2d, ((0, r_pad - R), (0, v_pad - V)))

    tgt = targets.reshape(-1, 1).astype(jnp.int32)
    msk = mask.reshape(-1, 1).astype(jnp.float32)
    if r_pad != R:
        tgt = jnp.pad(tgt, ((0, r_pad - R), (0, 0)))
        msk = jnp.pad(msk, ((0, r_pad - R), (0, 0)))

    grid = (r_pad // tm, v_pad // tv)

    row_nll = pl.pallas_call(
        functools.partial(_nll_rows_kernel, tv=tv),
        out_shape=jax.ShapeDtypeStruct((r_pad, 1), jnp.float32),
        grid_spec=pltpu.PrefetchScalarGridSpec(
            num_scalar_prefetch=0,
            grid=grid,
            in_specs=[
                pl.BlockSpec((tm, tv), lambda i, k: (i, k)),   # logits tiles
                pl.BlockSpec((tm, 1), lambda i, k: (i, 0)),    # targets
                pl.BlockSpec((tm, 1), lambda i, k: (i, 0)),    # mask
            ],
            out_specs=pl.BlockSpec((tm, 1), lambda i, k: (i, 0)),
        ),
        compiler_params=pltpu.CompilerParams(
            dimension_semantics=("parallel", "arbitrary")),
    )(logits2d, tgt, msk)

    # tiny final reduce (padded rows are exactly 0)
    return jnp.sum(row_nll)


# ------------------------------------------------------------------ MSE ----
def _mse_kernel(rec_ref, vid_ref, fm_ref, out_ref):
    @pl.when(pl.program_id(0) == 0)
    def _():
        out_ref[...] = jnp.zeros_like(out_ref)

    diff = fm_ref[...] * (rec_ref[...].astype(jnp.float32)
                          - vid_ref[...].astype(jnp.float32))
    out_ref[...] += jnp.sum(diff * diff).reshape(1, 1)


def _masked_mse_sum(rec_fts, video_fts, feats_mask, *, tile_rows=512):
    """sum((feats_mask * (rec - vid))**2) — bit-compatible with the PyTorch
    (fm*rec - fm*vid)**2 since fm is 0/1."""
    n, s, d = rec_fts.shape
    rows = n * s
    rec2 = rec_fts.reshape(rows, d)
    vid2 = video_fts.reshape(rows, d)
    fm2 = feats_mask.reshape(rows, 1).astype(jnp.float32)

    tm = _round_up(min(tile_rows, _round_up(rows, 8)), 8)
    r_pad = _round_up(rows, tm)
    if r_pad != rows:
        rec2 = jnp.pad(rec2, ((0, r_pad - rows), (0, 0)))
        vid2 = jnp.pad(vid2, ((0, r_pad - rows), (0, 0)))
        fm2 = jnp.pad(fm2, ((0, r_pad - rows), (0, 0)))   # padded mask = 0

    grid = (r_pad // tm,)

    out = pl.pallas_call(
        _mse_kernel,
        out_shape=jax.ShapeDtypeStruct((1, 1), jnp.float32),
        grid_spec=pltpu.PrefetchScalarGridSpec(
            num_scalar_prefetch=0,
            grid=grid,
            in_specs=[
                pl.BlockSpec((tm, d), lambda i: (i, 0)),
                pl.BlockSpec((tm, d), lambda i: (i, 0)),
                pl.BlockSpec((tm, 1), lambda i: (i, 0)),
            ],
            out_specs=pl.BlockSpec((1, 1), lambda i: (0, 0)),
        ),
        compiler_params=pltpu.CompilerParams(
            dimension_semantics=("arbitrary",)),
    )(rec2, vid2, fm2)

    return out[0, 0]


# ------------------------------------------------------------- wrapper ----
def language_model_criterion_with_syntax(
        logits_caption, target_caption, mask_caption,
        logits, target, mask,
        rec_fts, video_fts, feats_mask,
        caption_alpha=1.0, syntax_alpha=1.0, content_alpha=1.0,
        caption_tile_rows=256, caption_tile_vocab=2048):
    # Truncate targets/masks to the logits' sequence length (as in PyTorch).
    n_cap, tc_len, vc = logits_caption.shape
    target_caption = target_caption[:, :tc_len]
    mask_caption = mask_caption[:, :tc_len]

    n_pos, tp_len, vp = logits.shape
    target = target[:, :tp_len]
    mask = mask[:, :tp_len]

    n_vid, video_seq_num, _ = rec_fts.shape

    # big streamed term
    cap_sum = _masked_nll_sum(
        logits_caption.reshape(n_cap * tc_len, vc),
        target_caption.reshape(-1), mask_caption.reshape(-1),
        tile_rows=caption_tile_rows, tile_vocab=caption_tile_vocab)

    # small terms (separate tiny pallas_calls, hoisted out of the big loop)
    pos_sum = _masked_nll_sum(
        logits.reshape(n_pos * tp_len, vp),
        target.reshape(-1), mask.reshape(-1),
        tile_rows=256, tile_vocab=128)

    mse_sum = _masked_mse_sum(rec_fts, video_fts, feats_mask)

    # scalar glue (matches PyTorch: divide by batch size, not sum(mask))
    output_caption = (cap_sum / n_cap) * caption_alpha
    output_syntax = (pos_sum / n_pos) * syntax_alpha
    output_content = (mse_sum / n_vid / video_seq_num) * content_alpha
    output = output_syntax + output_content + output_caption
    return output, output_syntax, output_content, output_caption


if __name__ == "__main__":
    key = jax.random.PRNGKey(0)
    k = jax.random.split(key, 9)

    N = 2          # batch
    Tc = 24        # caption seq len
    Vc = 512       # caption vocab
    Tp = 8         # pos seq len
    Vp = 16        # pos tag vocab
    S = 4          # video seq num
    D = 128        # video feature dim

    # log-probabilities (as produced by a log-softmax head)
    logits_caption = jax.nn.log_softmax(
        jax.random.normal(k[0], (N, Tc, Vc), jnp.float32), axis=-1)
    target_caption = jax.random.randint(k[1], (N, Tc + 2), 0, Vc, jnp.int32)
    mask_caption = (jax.random.uniform(k[2], (N, Tc + 2)) > 0.2).astype(jnp.float32)

    logits_pos = jax.nn.log_softmax(
        jax.random.normal(k[3], (N, Tp, Vp), jnp.float32), axis=-1)
    target_pos = jax.random.randint(k[4], (N, Tp + 2), 0, Vp, jnp.int32)
    mask_pos = (jax.random.uniform(k[5], (N, Tp + 2)) > 0.2).astype(jnp.float32)

    rec_fts = jax.random.normal(k[6], (N, S, D), jnp.float32)
    video_fts = jax.random.normal(k[7], (N, S, D), jnp.float32)
    feats_mask = (jax.random.uniform(k[8], (N, S, 1)) > 0.1).astype(jnp.float32)

    caption_alpha, syntax_alpha, content_alpha = 1.0, 0.5, 0.1

    # small tiles here so the demo exercises the multi-step (rows x vocab) grid,
    # the vocab-axis accumulator, and the final-step mask fold; production
    # defaults are 256 x 2048.
    out = language_model_criterion_with_syntax(
        logits_caption, target_caption, mask_caption,
        logits_pos, target_pos, mask_pos,
        rec_fts, video_fts, feats_mask,
        caption_alpha=caption_alpha,
        syntax_alpha=syntax_alpha,
        content_alpha=content_alpha,
        caption_tile_rows=16, caption_tile_vocab=128)
    out = jax.block_until_ready(out)

    # pure-JAX reference check (same math, outside Pallas)
    tc = target_caption[:, :Tc]
    mc = mask_caption[:, :Tc]
    nll_c = -jnp.take_along_axis(logits_caption, tc[:, :, None], axis=-1)[..., 0]
    ref_cap = jnp.sum(nll_c * mc) / N * caption_alpha
    tp = target_pos[:, :Tp]
    mp = mask_pos[:, :Tp]
    nll_p = -jnp.take_along_axis(logits_pos, tp[:, :, None], axis=-1)[..., 0]
    ref_syn = jnp.sum(nll_p * mp) / N * syntax_alpha
    ref_con = jnp.sum((feats_mask * rec_fts - feats_mask * video_fts) ** 2) / N / S * content_alpha
    ref_total = ref_cap + ref_syn + ref_con

    assert jnp.allclose(out[0], ref_total, rtol=1e-5, atol=1e-5)
    assert jnp.allclose(out[1], ref_syn, rtol=1e-5, atol=1e-5)
    assert jnp.allclose(out[2], ref_con, rtol=1e-5, atol=1e-5)
    assert jnp.allclose(out[3], ref_cap, rtol=1e-5, atol=1e-5)

    print("KERNEL_OK")
</pallas_src>

<mosaic_0001>
module attributes {stable_mosaic.version = 11 : i64} {
  func.func @_nll_rows_kernel(%arg0: i32, %arg1: i32, %arg2: memref<16x128xf32, #tpu.memory_space<vmem>>, %arg3: memref<16x1xi32, #tpu.memory_space<vmem>>, %arg4: memref<16x1xf32, #tpu.memory_space<vmem>>, %arg5: memref<16x1xf32, #tpu.memory_space<vmem>>) attributes {dimension_semantics = [#tpu.dimension_semantics<parallel>, #tpu.dimension_semantics<arbitrary>], iteration_bounds = array<i64: 3, 4>, scalar_prefetch = 0 : i64, scratch_operands = 0 : i64, tpu.core_type = #tpu.core_type<tc>, window_params = [{transform_indices = @transform_0, window_bounds = array<i64: 16, 128>}, {transform_indices = @transform_1, window_bounds = array<i64: 16, 1>}, {transform_indices = @transform_2, window_bounds = array<i64: 16, 1>}, {transform_indices = @transform_3, window_bounds = array<i64: 16, 1>}]} {
    %c0_i32 = arith.constant 0 : i32
    %0 = arith.cmpi eq, %arg1, %c0_i32 : i32
    %1 = arith.extui %0 : i1 to i32
    %c0_i32_0 = arith.constant 0 : i32
    %2 = arith.cmpi ne, %1, %c0_i32_0 : i32
    scf.if %2 {
      %cst_11 = arith.constant 0.000000e+00 : f32
      %23 = vector.broadcast %cst_11 : f32 to vector<16x1xf32>
      %c0_12 = arith.constant 0 : index
      %c0_13 = arith.constant 0 : index
      %24 = vector.load %arg5[%c0_12, %c0_13] : memref<16x1xf32, #tpu.memory_space<vmem>>, vector<16x1xf32>
      tpu.vector_store %arg5[%c0_12, %c0_13], %23 {strides = array<i32>} : memref<16x1xf32, #tpu.memory_space<vmem>>, vector<16x1xf32>,
    } else {
    }
    %c0 = arith.constant 0 : index
    %c0_1 = arith.constant 0 : index
    %3 = vector.load %arg2[%c0, %c0_1] : memref<16x128xf32, #tpu.memory_space<vmem>>, vector<16x128xf32>
    %c128_i32 = arith.constant 128 : i32
    %4 = arith.muli %arg1, %c128_i32 : i32
    %5 = tpu.iota {dimensions = array<i32: 1>} : vector<16x128xi32>
    %6 = vector.broadcast %4 : i32 to vector<16x128xi32>
    %7 = arith.addi %6, %5 : vector<16x128xi32>
    %c0_2 = arith.constant 0 : index
    %c0_3 = arith.constant 0 : index
    %8 = vector.load %arg3[%c0_2, %c0_3] : memref<16x1xi32, #tpu.memory_space<vmem>>, vector<16x1xi32>
    %9 = vector.broadcast %8 : vector<16x1xi32> to vector<16x128xi32>
    %10 = arith.cmpi eq, %7, %9 : vector<16x128xi32>
    %cst = arith.constant 0.000000e+00 : f32
    %11 = vector.broadcast %cst : f32 to vector<16x128xf32>
    %12 = arith.select %10, %3, %11 : vector<16x128xi1>, vector<16x128xf32>
    %c0_4 = arith.constant 0 : index
    %c0_5 = arith.constant 0 : index
    %13 = vector.load %arg5[%c0_4, %c0_5] : memref<16x1xf32, #tpu.memory_space<vmem>>, vector<16x1xf32>
    %cst_6 = arith.constant dense<0.000000e+00> : vector<16xf32>
    %14 = vector.multi_reduction <add>, %12, %cst_6 [1] : vector<16x128xf32> to vector<16xf32>
    %15 = vector.shape_cast %14 : vector<16xf32> to vector<16x1xf32>
    %cst_7 = arith.constant 0.000000e+00 : f32
    %16 = vector.broadcast %cst_7 : f32 to vector<16x1xf32>
    %17 = arith.subf %16, %15 : vector<16x1xf32>
    %18 = arith.addf %13, %17 : vector<16x1xf32>
    %c0_8 = arith.constant 0 : index
    %c0_9 = arith.constant 0 : index
    %19 = vector.load %arg5[%c0_8, %c0_9] : memref<16x1xf32, #tpu.memory_space<vmem>>, vector<16x1xf32>
    tpu.vector_store %arg5[%c0_8, %c0_9], %18 {strides = array<i32>} : memref<16x1xf32, #tpu.memory_space<vmem>>, vector<16x1xf32>,
    %c3_i32 = arith.constant 3 : i32
    %20 = arith.cmpi eq, %arg1, %c3_i32 : i32
    %21 = arith.extui %20 : i1 to i32
    %c0_i32_10 = arith.constant 0 : i32
    %22 = arith.cmpi ne, %21, %c0_i32_10 : i32
    scf.if %22 {
      %c0_11 = arith.constant 0 : index
      %c0_12 = arith.constant 0 : index
      %23 = vector.load %arg5[%c0_11, %c0_12] : memref<16x1xf32, #tpu.memory_space<vmem>>, vector<16x1xf32>
      %c0_13 = arith.constant 0 : index
      %c0_14 = arith.constant 0 : index
      %24 = vector.load %arg4[%c0_13, %c0_14] : memref<16x1xf32, #tpu.memory_space<vmem>>, vector<16x1xf32>
      %25 = arith.mulf %23, %24 : vector<16x1xf32>
      %c0_15 = arith.constant 0 : index
      %c0_16 = arith.constant 0 : index
      %26 = vector.load %arg5[%c0_15, %c0_16] : memref<16x1xf32, #tpu.memory_space<vmem>>, vector<16x1xf32>
      tpu.vector_store %arg5[%c0_15, %c0_16], %25 {strides = array<i32>} : memref<16x1xf32, #tpu.memory_space<vmem>>, vector<16x1xf32>,
    } else {
    }
    return
  }
  func.func @transform_0(%arg0: i32, %arg1: i32) -> (i32, i32) {
    %c0_i32 = arith.constant 0 : i32
    return %arg0, %arg1 : i32, i32
  }
  func.func @transform_1(%arg0: i32, %arg1: i32) -> (i32, i32) {
    %c0_i32 = arith.constant 0 : i32
    %c0_i32_0 = arith.constant 0 : i32
    return %arg0, %c0_i32 : i32, i32
  }
  func.func @transform_2(%arg0: i32, %arg1: i32) -> (i32, i32) {
    %c0_i32 = arith.constant 0 : i32
    %c0_i32_0 = arith.constant 0 : i32
    return %arg0, %c0_i32 : i32, i32
  }
  func.func @transform_3(%arg0: i32, %arg1: i32) -> (i32, i32) {
    %c0_i32 = arith.constant 0 : i32
    %c0_i32_0 = arith.constant 0 : i32
    return %arg0, %c0_i32 : i32, i32
  }
}

</mosaic_0001>

<llo_original>
// kernel: tpu_custom_call.1
$region0: #{tpu_custom_call.1}
  #allocation0 [shape = 'u32[]', space=smem, size = 0x4, offset = 0x4, fixed_abs, tag = 'smem constant byte address 0x4 - core index']
  #allocation1 [shape = 'u32[144,128]{1,0:T(1,128)}', space=vmem, size = 0x12000, scoped, tag = 'internal scratch']
  %s0 = inlined_call_operand.hbm [shape: f32[48,512], index: 0, kind: input, shape index: {}]
  %s1 = inlined_call_operand.vmem [shape: s32[48,1], index: 1, kind: input, shape index: {}]
  %s2 = inlined_call_operand.vmem [shape: f32[48,1], index: 2, kind: input, shape index: {}]
  %s3 = inlined_call_operand.vmem [shape: f32[48,1], index: 3, kind: output, shape index: {}]
  %s4 = sld [smem:[#allocation0]]
  $region57: #{tpu_custom_call.1} parent=0
    _
  %s6 = ssub.s32 1, %s4
  %s7 = scalar_select 0, %s6, %s4
  $region1: #{tpu_custom_call.1} parent=0
    #allocation2 [shape = 'u8[16384]{0}', space=vmem, size = 0x4000, scoped, tag = 'input window, operand 0']
    #allocation3 [shape = 's32[2]{0}', space=sflag, size = 0x8, scoped, tag = 'scoped memory for tpu_custom_call.1']
    %8 = vsyncpa [#allocation3], 0
    %s9 = scalar_lea.sflag [#allocation3], 1
    %10 = vsyncpa %s9, 0
    loop: start=0, step=1, limit=14
    $region2: #{tpu_custom_call.1} parent=1 // loop_pre_header
      _
    $region3: #{tpu_custom_call.1} parent=1 // loop_header
      %s12 = sphi 0, %s16
      %p13 = scmp.ge.s32.totalorder %s12, 14
      %s19 = sphi 0, %s31
      %s20 = sphi 0, %s27
      %s21 = sphi 0, %s19
      %s22 = sphi 0, %s20
      %s23 = sphi 0, %s21
      %s24 = sphi 0, %s22
      %s36 = sphi 0, %s38
      %s39 = sphi 0, %s36
      %s40 = sphi 0, %s39
      %s56 = sphi 0, %s40
      %s62 = sphi 0, %s64
      %s65 = sphi 0, %s62
      %s66 = sphi 0, %s65
      %s82 = sphi 0, %s66
      %s88 = sphi 0, %s90
      %s91 = sphi 0, %s88
      %s92 = sphi 0, %s91
      %s108 = sphi 0, %s92
      %s114 = sphi 0, %s116
      %s117 = sphi 0, %s114
      %s118 = sphi 0, %s117
      %s134 = sphi 0, %s118
    $region4: #{tpu_custom_call.1} parent=1 // loop_header_branch
      %15 = sbr.rel (%p13) target = $region8
    $region5: #{tpu_custom_call.1} parent=1 // loop_body
      %s17 = ssub.s32 %s12, 1
      %s18 = ssub.s32 %s12, 2
      %s25 = sadd.s32 1, %s20
      %p26 = scmp.ge.s32.totalorder %s25, 4
      %s27 = scalar_select %p26, 0, %s25
      %s28 = sadd.s32 1, %s19
      %s29 = scalar_select %p26, %s28, %s19
      %p30 = scmp.ge.s32.totalorder %s29, 3
      %s31 = scalar_select %p30, 0, %s29
      %s32 = ssub.s32 %s19, %s31
      %s33 = ssub.s32 %s20, %s27
      %s34 = sor.u32 %s32, %s33
      %p35 = scmp.eq.s32.totalorder %s34, 0
      %s37 = sadd.s32 %s36, 1
      %s38 = scalar_select %p35, %s36, %s37
      %p41 = pneg %p35
      %p42 = scmp.eq.s32.totalorder %s12, 11
      %p43 = por %p41, %p42
      %p44 = scmp.ne.s32.totalorder %s36, %s39
      %p45 = scmp.eq.s32.totalorder %s12, 0
      %p46 = por %p44, %p45
      %p47 = scmp.ne.s32.totalorder %s36, %s39
      %p48 = scmp.eq.s32.totalorder %s17, 11
      %p49 = por %p47, %p48
      %p50 = scmp.ne.s32.totalorder %s39, %s40
      %p51 = scmp.eq.s32.totalorder %s17, 0
      %p52 = por %p50, %p51
      %p53 = scmp.ne.s32.totalorder %s39, %s40
      %p54 = scmp.eq.s32.totalorder %s18, 11
      %p55 = por %p53, %p54
      %p57 = scmp.ne.s32.totalorder %s40, %s56
      %p58 = scmp.eq.s32.totalorder %s18, 0
      %p59 = por %p57, %p58
      %s60 = ssub.s32 %s19, %s31
      %p61 = scmp.eq.s32.totalorder %s60, 0
      %s63 = sadd.s32 %s62, 1
      %s64 = scalar_select %p61, %s62, %s63
      %p67 = pneg %p61
      %p68 = scmp.eq.s32.totalorder %s12, 11
      %p69 = por %p67, %p68
      %p70 = scmp.ne.s32.totalorder %s62, %s65
      %p71 = scmp.eq.s32.totalorder %s12, 0
      %p72 = por %p70, %p71
      %p73 = scmp.ne.s32.totalorder %s62, %s65
      %p74 = scmp.eq.s32.totalorder %s17, 11
      %p75 = por %p73, %p74
      %p76 = scmp.ne.s32.totalorder %s65, %s66
      %p77 = scmp.eq.s32.totalorder %s17, 0
      %p78 = por %p76, %p77
      %p79 = scmp.ne.s32.totalorder %s65, %s66
      %p80 = scmp.eq.s32.totalorder %s18, 11
      %p81 = por %p79, %p80
      %p83 = scmp.ne.s32.totalorder %s66, %s82
      %p84 = scmp.eq.s32.totalorder %s18, 0
      %p85 = por %p83, %p84
      %s86 = ssub.s32 %s19, %s31
      %p87 = scmp.eq.s32.totalorder %s86, 0
      %s89 = sadd.s32 %s88, 1
      %s90 = scalar_select %p87, %s88, %s89
      %p93 = pneg %p87
      %p94 = scmp.eq.s32.totalorder %s12, 11
      %p95 = por %p93, %p94
      %p96 = scmp.ne.s32.totalorder %s88, %s91
      %p97 = scmp.eq.s32.totalorder %s12, 0
      %p98 = por %p96, %p97
      %p99 = scmp.ne.s32.totalorder %s88, %s91
      %p100 = scmp.eq.s32.totalorder %s17, 11
      %p101 = por %p99, %p100
      %p102 = scmp.ne.s32.totalorder %s91, %s92
      %p103 = scmp.eq.s32.totalorder %s17, 0
      %p104 = por %p102, %p103
      %p105 = scmp.ne.s32.totalorder %s91, %s92
      %p106 = scmp.eq.s32.totalorder %s18, 11
      %p107 = por %p105, %p106
      %p109 = scmp.ne.s32.totalorder %s92, %s108
      %p110 = scmp.eq.s32.totalorder %s18, 0
      %p111 = por %p109, %p110
      %s112 = ssub.s32 %s19, %s31
      %p113 = scmp.eq.s32.totalorder %s112, 0
      %s115 = sadd.s32 %s114, 1
      %s116 = scalar_select %p113, %s114, %s115
      %p119 = pneg %p113
      %p120 = scmp.eq.s32.totalorder %s12, 11
      %p121 = por %p119, %p120
      %p122 = scmp.ne.s32.totalorder %s114, %s117
      %p123 = scmp.eq.s32.totalorder %s12, 0
      %p124 = por %p122, %p123
      %p125 = scmp.ne.s32.totalorder %s114, %s117
      %p126 = scmp.eq.s32.totalorder %s17, 11
      %p127 = por %p125, %p126
      %p128 = scmp.ne.s32.totalorder %s117, %s118
      %p129 = scmp.eq.s32.totalorder %s17, 0
      %p130 = por %p128, %p129
      %p131 = scmp.ne.s32.totalorder %s117, %s118
      %p132 = scmp.eq.s32.totalorder %s18, 11
      %p133 = por %p131, %p132
      %p135 = scmp.ne.s32.totalorder %s118, %s134
      %p136 = scmp.eq.s32.totalorder %s18, 0
      %p137 = por %p135, %p136
      %p138 = scmp.le.s32.totalorder 1, %s12
      %p139 = scmp.lt.s32.totalorder %s12, 13
      %p140 = pnand %p138, %p139
      %p141 = pneg %p140
      // Predicated region
      $region9: #{tpu_custom_call.1} parent=5 // pred_check
        _
      $region10: #{tpu_custom_call.1} parent=5 // pred_check_branch
        %143 = sbr.rel (%p140) target = $region12
      $region11: #{tpu_custom_call.1} parent=5 // pred_region
        %s144 = ssub.s32 %s12, 1
      $region12: #{tpu_custom_call.1} parent=5 // pred_fallthru
        _
      %p145 = scmp.lt.s32.totalorder %s12, 12
      // Predicated region
      $region13: #{tpu_custom_call.1} parent=5 // pred_check
        %p146 = pneg %p145
      $region14: #{tpu_custom_call.1} parent=5 // pred_check_branch
        %148 = sbr.rel (%p146) target = $region16
      $region15: #{tpu_custom_call.1} parent=5 // pred_region
        // Predicated region
        $region17: #{tpu_custom_call.1} parent=15 // pred_check
          %p149 = pneg %p46
        $region18: #{tpu_custom_call.1} parent=15 // pred_check_branch
          %151 = sbr.rel (%p149) target = $region20
        $region19: #{tpu_custom_call.1} parent=15 // pred_region
          %s152 = sand.u32 %s36, 1
          %s153 = scalar_lea.sflag [#allocation3], %s152
          %s154 = sand.u32 %s36, 1
          %s155 = smul.addr %s154, 16
          %s156 = scalar_lea.vmem [#allocation2], %s155
          %s157 = smul.u32 2, %s19
          %s159 = ssub.s32 256, 256
          %160 = vsyncadd %s153, %s159
          %s161 = smul.addr %s157, 4
          %s162 = sadd.s32 %s20, %s161
          %s163 = smul.addr %s162, 128
          %s164 = scalar_lea.hbm %s0, %s163
          %s165 = sshll.u32 %s156, 4
          %s166 = int_to_ptr.vmem [resolvable:$true] %s165
          %171 = dma.hbm_to_vmem [thread:$0]  %s164, 256, %s166, %s153, 512, 128, 8
        $region20: #{tpu_custom_call.1} parent=15 // pred_fallthru
          _
        // Predicated region
        $region21: #{tpu_custom_call.1} parent=15 // pred_check
          %p172 = pneg %p72
        $region22: #{tpu_custom_call.1} parent=15 // pred_check_branch
          %174 = sbr.rel (%p172) target = $region24
        $region23: #{tpu_custom_call.1} parent=15 // pred_region
          %s175 = smul.u32 2, %s19
          %p176 = scmp.lt.s32.totalorder %s175, 5
          %s177 = scalar_select %p176, %s175, 5
          %s178 = smul.addr %s177, 8
          %s179 = scalar_lea.vmem %s1, %s178
          %s180 = smul.u32 2, %s19
        $region24: #{tpu_custom_call.1} parent=15 // pred_fallthru
          _
        // Predicated region
        $region25: #{tpu_custom_call.1} parent=15 // pred_check
          %p181 = pneg %p98
        $region26: #{tpu_custom_call.1} parent=15 // pred_check_branch
          %183 = sbr.rel (%p181) target = $region28
        $region27: #{tpu_custom_call.1} parent=15 // pred_region
          %s184 = smul.u32 2, %s19
          %p185 = scmp.lt.s32.totalorder %s184, 5
          %s186 = scalar_select %p185, %s184, 5
          %s187 = smul.addr %s186, 8
          %s188 = scalar_lea.vmem %s2, %s187
          %s189 = smul.u32 2, %s19
        $region28: #{tpu_custom_call.1} parent=15 // pred_fallthru
          _
      $region16: #{tpu_custom_call.1} parent=5 // pred_fallthru
        _
      %p190 = scmp.le.s32.totalorder 1, %s12
      %p191 = scmp.lt.s32.totalorder %s12, 13
      %p192 = pnand %p190, %p191
      %p193 = pneg %p192
      // Predicated region
      $region29: #{tpu_custom_call.1} parent=5 // pred_check
        _
      $region30: #{tpu_custom_call.1} parent=5 // pred_check_branch
        %195 = sbr.rel (%p192) target = $region32
      $region31: #{tpu_custom_call.1} parent=5 // pred_region
        %s196 = ssub.s32 %s12, 1
        %s197 = sand.u32 %s39, 1
        %s198 = scalar_lea.sflag [#allocation3], %s197
        %s199 = sand.u32 %s39, 1
        %s200 = smul.addr %s199, 16
        %s201 = scalar_lea.vmem [#allocation2], %s200
        // Predicated region
        $region33: #{tpu_custom_call.1} parent=31 // pred_check
          %p202 = pneg %p52
        $region34: #{tpu_custom_call.1} parent=31 // pred_check_branch
          %204 = sbr.rel (%p202) target = $region36
        $region35: #{tpu_custom_call.1} parent=31 // pred_region
          %205 = dma.done %s198, 256
        $region36: #{tpu_custom_call.1} parent=31 // pred_fallthru
          _
        %s206 = sand.u32 %s39, 1
        %s207 = scalar_lea.sflag [#allocation3], %s206
        %s208 = sand.u32 %s39, 1
        %s209 = smul.addr %s208, 16
        %s210 = scalar_lea.vmem [#allocation2], %s209
        %p211 = pneg %p52
        %p212 = pneg %p49
        %s213 = smul.u32 2, %s21
        %p214 = scmp.lt.s32.totalorder %s213, 5
        %s215 = scalar_select %p214, %s213, 5
        %s216 = smul.addr %s215, 8
        %s217 = scalar_lea.vmem %s1, %s216
        %p218 = pneg %p78
        %p219 = pneg %p75
        %s220 = smul.u32 2, %s21
        %p221 = scmp.lt.s32.totalorder %s220, 5
        %s222 = scalar_select %p221, %s220, 5
        %s223 = smul.addr %s222, 8
        %s224 = scalar_lea.vmem %s2, %s223
        %p225 = pneg %p104
        %p226 = pneg %p101
        %p227 = pneg %p130
        %p228 = pneg %p127
        %s229 = smul.u32 2, %s21
        %p230 = scmp.lt.s32.totalorder %s229, 5
        %s231 = scalar_select %p230, %s229, 5
        %s232 = smul.addr %s231, 8
        %s233 = scalar_lea.vmem %s3, %s232
        %s234 = smul.u32 2, %s21
        %s235 = smul.u32 2, %s21
        %p236 = scmp.lt.s32.totalorder %s235, 5
        %s237 = scalar_select %p236, %s235, 5
        %s238 = smul.addr %s237, 8
        %s239 = scalar_lea.vmem %s1, %s238
        %s240 = smul.u32 2, %s21
        %s241 = smul.u32 2, %s21
        %p242 = scmp.lt.s32.totalorder %s241, 5
        %s243 = scalar_select %p242, %s241, 5
        %s244 = smul.addr %s243, 8
        %s245 = scalar_lea.vmem %s2, %s244
        %s246 = smul.u32 2, %s21
        %s247 = smul.u32 2, %s21
        %p248 = scmp.lt.s32.totalorder %s247, 5
        %s249 = scalar_select %p248, %s247, 5
        %s250 = smul.addr %s249, 8
        %s251 = scalar_lea.vmem %s3, %s250
        %s252 = smul.u32 2, %s21
        %p253 = scmp.eq.s32.totalorder %s22, 0
        // Predicated region
        $region37: #{tpu_custom_call.1} parent=31 // pred_check
          %p254 = pneg %p253
        $region38: #{tpu_custom_call.1} parent=31 // pred_check_branch
          %256 = sbr.rel (%p254) target = $region40
        $region39: #{tpu_custom_call.1} parent=31 // pred_region
          %vm257 = vcmask 7168
          %258 = vst.msk [vmem:[%s251] sm:$0xff] %vm257, 0.0
          %259 = vst.msk [vmem:[%s251 + $0x8] sm:$0xff] %vm257, 0.0
        $region40: #{tpu_custom_call.1} parent=31 // pred_fallthru
          _
        %v260 = vld [vmem:[%s201] sm:$0xff]
        %v261 = vld [vmem:[%s201 + $0x8] sm:$0xff]
        %s262 = smul.u32 %s22, 128
        %v263 = vlaneseq
        %v264 = vand.u32 %v263, 127
        %v265 = vstv %s262
        %v266 = vadd.s32 %v265, %v264
        %v267 = vld [vmem:[%s239] sm:$0xff]
        %v268 = vld [vmem:[%s239 + $0x8] sm:$0xff]
        %269 = vset.pattern.permute.xlu0 0
        %270 = vperm.xlu0 %269, %v267
        %v271 = vpop.permute.xlu0 %270
        %272 = vset.pattern.permute.xlu0 0
        %273 = vperm.xlu0 %272, %v268
        %v274 = vpop.permute.xlu0 %273
        %vm275 = vcmp.eq.s32.totalorder %v266, %v271
        %vm276 = vcmp.eq.s32.totalorder %v266, %v274
        %v277 = vsel %vm275, %v260, 0.0
        %v278 = vsel %vm276, %v261, 0.0
        %v279 = vld [vmem:[%s251] sm:$0xff]
        %v280 = vld [vmem:[%s251 + $0x8] sm:$0xff]
        %281 = vadd.xlane.f32.xlu0 %v277
        %v282 = vpop.xlane.xlu0 %281
        %283 = vadd.xlane.f32.xlu0 %v278
        %v284 = vpop.xlane.xlu0 %283
        %v285 = vsub.f32 0.0, %v282
        %v286 = vsub.f32 0.0, %v284
        %v287 = vadd.f32 %v279, %v285
        %v288 = vadd.f32 %v280, %v286
        %vm289 = vcmask 7168
        %290 = vst.msk [vmem:[%s251] sm:$0xff] %vm289, %v287
        %291 = vst.msk [vmem:[%s251 + $0x8] sm:$0xff] %vm289, %v288
        %p292 = scmp.eq.s32.totalorder %s22, 3
        // Predicated region
        $region41: #{tpu_custom_call.1} parent=31 // pred_check
          %p293 = pneg %p292
        $region42: #{tpu_custom_call.1} parent=31 // pred_check_branch
          %295 = sbr.rel (%p293) target = $region44
        $region43: #{tpu_custom_call.1} parent=31 // pred_region
          %v296 = vld [vmem:[%s251] sm:$0xff]
          %v297 = vld [vmem:[%s251 + $0x8] sm:$0xff]
          %v298 = vld [vmem:[%s245] sm:$0xff]
          %v299 = vld [vmem:[%s245 + $0x8] sm:$0xff]
          %v300 = vmul.f32 %v296, %v298
          %v301 = vmul.f32 %v297, %v299
          %302 = vst.msk [vmem:[%s251] sm:$0xff] %vm289, %v300
          %303 = vst.msk [vmem:[%s251 + $0x8] sm:$0xff] %vm289, %v301
        $region44: #{tpu_custom_call.1} parent=31 // pred_fallthru
          _
        %s304 = smul.u32 2, %s21
        %p305 = scmp.lt.s32.totalorder %s304, 5
        %s306 = scalar_select %p305, %s304, 5
        %s307 = smul.addr %s306, 8
        %s308 = scalar_lea.vmem %s3, %s307
        // Predicated region
        $region45: #{tpu_custom_call.1} parent=31 // pred_check
          %p309 = pneg %p127
        $region46: #{tpu_custom_call.1} parent=31 // pred_check_branch
          %311 = sbr.rel (%p309) target = $region48
        $region47: #{tpu_custom_call.1} parent=31 // pred_region
          %s312 = smul.u32 2, %s21
        $region48: #{tpu_custom_call.1} parent=31 // pred_fallthru
          _
      $region32: #{tpu_custom_call.1} parent=5 // pred_fallthru
        _
      %p313 = scmp.le.s32.totalorder 2, %s12
      // Predicated region
      $region49: #{tpu_custom_call.1} parent=5 // pred_check
        %p314 = pneg %p313
      $region50: #{tpu_custom_call.1} parent=5 // pred_check_branch
        %316 = sbr.rel (%p314) target = $region52
      $region51: #{tpu_custom_call.1} parent=5 // pred_region
        %s317 = ssub.s32 %s12, 2
        // Predicated region
        $region53: #{tpu_custom_call.1} parent=51 // pred_check
          %p318 = pneg %p133
        $region54: #{tpu_custom_call.1} parent=51 // pred_check_branch
          %320 = sbr.rel (%p318) target = $region56
        $region55: #{tpu_custom_call.1} parent=51 // pred_region
          %s321 = smul.u32 2, %s23
          %p322 = scmp.lt.s32.totalorder %s321, 5
          %s323 = scalar_select %p322, %s321, 5
          %s324 = smul.addr %s323, 8
          %s325 = scalar_lea.vmem %s3, %s324
        $region56: #{tpu_custom_call.1} parent=51 // pred_fallthru
          _
      $region52: #{tpu_custom_call.1} parent=5 // pred_fallthru
        _
    $region6: #{tpu_custom_call.1} parent=1 // loop_footer
      %s16 = sadd.s32 1, %s12
    $region7: #{tpu_custom_call.1} parent=1 // loop_footer_branch
      %11 = sbr.rel target = $region3
    $region8: #{tpu_custom_call.1} parent=1 // loop_exit
      _
    %326 = vsyncpa [#allocation3], 1
    %s327 = scalar_lea.sflag [#allocation3], 1
    %328 = vsyncpa %s327, 1

</llo_original>
